<compile_context>
chip_gen: v5e
topology: v5e:2x2
jax: 0.10.0
libtpu: 0.0.40
codegen_flags: <defaults>
</compile_context>

<pallas_src>
import jax
import jax.numpy as jnp
from jax.experimental import pallas as pl
from jax.experimental.pallas import tpu as pltpu


# ------------------------------------------------------------------ utilities
def _round_up(x, m):
    return (x + m - 1) // m * m


# ------------------------------------------------------------- Pallas kernel
def _policy_kernel(x_ref,
                   w1_ref, b1_ref,
                   w2_ref, b2_ref,
                   w3_ref, b3_ref,
                   w4_ref, b4_ref,
                   o_ref):
    """Fused MLP: tanh(relu(relu(relu(x@W1+b1)@W2+b2)@W3+b3)@W4+b4)."""
    h = x_ref[...].astype(jnp.bfloat16)                       # (TM, C) bf16

    h = jnp.dot(h, w1_ref[...], preferred_element_type=jnp.float32) + b1_ref[...]
    h = jnp.maximum(h, 0.0).astype(jnp.bfloat16)              # (TM, 128)

    h = jnp.dot(h, w2_ref[...], preferred_element_type=jnp.float32) + b2_ref[...]
    h = jnp.maximum(h, 0.0).astype(jnp.bfloat16)              # (TM, 128)

    h = jnp.dot(h, w3_ref[...], preferred_element_type=jnp.float32) + b3_ref[...]
    h = jnp.maximum(h, 0.0).astype(jnp.bfloat16)              # (TM, C//2)

    h = jnp.dot(h, w4_ref[...], preferred_element_type=jnp.float32) + b4_ref[...]
    # Only the first 2 lanes are real outputs; slice in VMEM, store a (TM, 2) block.
    o_ref[...] = jnp.tanh(h[:, : o_ref.shape[-1]])


# ----------------------------------------------------------------- wrapper
_MAX_TM = 512   # largest batch tile for the big-batch path


def _choose_batch_tiling(M):
    Mp = _round_up(M, 16)            # bf16 LHS packs 16 sublanes per vreg
    if Mp <= 256:
        return Mp, Mp                # tiny batch: single block (launch-bound anyway)
    # Keep the grid >= 2 steps so "parallel" can shard across v7x's two TensorCores,
    # while using the largest tile (<= 512) that amortizes per-step overhead.
    TM = min(_MAX_TM, _round_up(pl.cdiv(Mp, 2), 128))
    Mp = _round_up(Mp, TM)
    return Mp, TM


def policy_forward(x, params):
    """Equivalent of Policy.forward(x) for x of shape (batch, in_channels)."""
    M, C = x.shape
    Hidden = params["w1"].shape[1]   # padded activation lane width (128)
    Hmid = params["w3"].shape[1]     # true in_channels // 2
    O = 2

    Mp, TM = _choose_batch_tiling(M)

    xb = x.astype(jnp.bfloat16)      # kernel consumes bf16 anyway; halves input DMA
    if Mp != M:
        xb = jnp.zeros((Mp, C), jnp.bfloat16).at[:M].set(xb)

    inv = lambda i: (0, 0)           # grid-invariant operands (weights / biases)
    in_specs = [
        pl.BlockSpec((TM, C), lambda i: (i, 0)),
        pl.BlockSpec((C, Hidden), inv),      pl.BlockSpec((1, Hidden), inv),
        pl.BlockSpec((Hidden, Hidden), inv), pl.BlockSpec((1, Hidden), inv),
        pl.BlockSpec((Hidden, Hmid), inv),   pl.BlockSpec((1, Hmid), inv),
        pl.BlockSpec((Hmid, Hidden), inv),   pl.BlockSpec((1, Hidden), inv),
    ]

    out = pl.pallas_call(
        _policy_kernel,
        out_shape=jax.ShapeDtypeStruct((Mp, O), jnp.float32),
        grid=(Mp // TM,),
        in_specs=in_specs,
        out_specs=pl.BlockSpec((TM, O), lambda i: (i, 0)),
        compiler_params=pltpu.CompilerParams(
            dimension_semantics=("parallel",)),
    )(xb,
      params["w1"], params["b1"],
      params["w2"], params["b2"],
      params["w3"], params["b3"],
      params["w4"], params["b4"])

    return out[:M] if Mp != M else out


# ---------------------------------------------------------------- parameters
def _linear_init(key, fan_in, fan_out):
    """PyTorch-style nn.Linear default init (uniform +-1/sqrt(fan_in))."""
    kw, kb = jax.random.split(key)
    bound = 1.0 / jnp.sqrt(float(fan_in))
    w = jax.random.uniform(kw, (fan_in, fan_out), jnp.float32, -bound, bound)
    b = jax.random.uniform(kb, (fan_out,), jnp.float32, -bound, bound)
    return w, b


def _pad_wb(w, b, kp, np_):
    """Zero-pad a (fan_in, fan_out) weight / (fan_out,) bias to (kp, np_) / (1, np_).

    Weights are stored bf16 (MXU-native); biases stay f32 for the epilogue add.
    """
    k, n = w.shape
    wp = jnp.zeros((kp, np_), jnp.float32).at[:k, :n].set(w).astype(jnp.bfloat16)
    bp = jnp.zeros((1, np_), jnp.float32).at[0, :n].set(b)
    return wp, bp


def init_params(key, in_channels):
    """Returns (kernel_params, unpadded_f32_reference_params)."""
    c, h = in_channels, in_channels // 2
    cp = _round_up(c, 128)           # padded activation lane width

    k1, k2, k3, k4 = jax.random.split(key, 4)
    w1, b1 = _linear_init(k1, c, c)
    w2, b2 = _linear_init(k2, c, c)
    w3, b3 = _linear_init(k3, c, h)
    w4, b4 = _linear_init(k4, h, 2)

    params = {}
    # w1: true K (=c), N padded so hidden activations become lane-dense.
    params["w1"], params["b1"] = _pad_wb(w1, b1, c, cp)
    # w2: K and N both padded (its input is the padded hidden activation).
    params["w2"], params["b2"] = _pad_wb(w2, b2, cp, cp)
    # w3: K padded, N kept at the true c//2 (full-dim block is legal).
    params["w3"], params["b3"] = _pad_wb(w3, b3, cp, h)
    # w4: true K (=c//2), N padded so the final matmul result stays lane-dense.
    params["w4"], params["b4"] = _pad_wb(w4, b4, h, cp)

    ref = dict(w1=w1, b1=b1, w2=w2, b2=b2, w3=w3, b3=b3, w4=w4, b4=b4)
    return params, ref


def _reference_forward(x, r):
    h = jnp.maximum(x @ r["w1"] + r["b1"], 0.0)
    h = jnp.maximum(h @ r["w2"] + r["b2"], 0.0)
    h = jnp.maximum(h @ r["w3"] + r["b3"], 0.0)
    return jnp.tanh(h @ r["w4"] + r["b4"])


# ---------------------------------------------------------------------- main
if __name__ == "__main__":
    IN_CHANNELS = 32
    BATCH = 2

    key = jax.random.PRNGKey(0)
    k_params, k_input, k_big = jax.random.split(key, 3)

    params, ref = init_params(k_params, IN_CHANNELS)
    fwd = jax.jit(policy_forward)

    # --- small batch (the spec's shape) --------------------------------------
    x = jax.random.normal(k_input, (BATCH, IN_CHANNELS), jnp.float32)
    out = jax.block_until_ready(fwd(x, params))
    assert out.shape == (BATCH, 2), out.shape
    assert bool(jnp.all(jnp.isfinite(out)))
    err = float(jnp.max(jnp.abs(out - _reference_forward(x, ref))))
    assert err < 0.05, err            # bf16-MXU kernel vs pure-f32 reference

    # --- larger batch: exercises the multi-tile "parallel" grid path ---------
    xb = jax.random.normal(k_big, (300, IN_CHANNELS), jnp.float32)
    outb = jax.block_until_ready(fwd(xb, params))
    assert outb.shape == (300, 2), outb.shape
    errb = float(jnp.max(jnp.abs(outb - _reference_forward(xb, ref))))
    assert errb < 0.05, errb

    print("KERNEL_OK")
</pallas_src>

<mosaic_0001>
module attributes {stable_mosaic.version = 11 : i64} {
  func.func @_policy_kernel(%arg0: i32, %arg1: memref<16x32xbf16, #tpu.memory_space<vmem>>, %arg2: memref<32x128xbf16, #tpu.memory_space<vmem>>, %arg3: memref<1x128xf32, #tpu.memory_space<vmem>>, %arg4: memref<128x128xbf16, #tpu.memory_space<vmem>>, %arg5: memref<1x128xf32, #tpu.memory_space<vmem>>, %arg6: memref<128x16xbf16, #tpu.memory_space<vmem>>, %arg7: memref<1x16xf32, #tpu.memory_space<vmem>>, %arg8: memref<16x128xbf16, #tpu.memory_space<vmem>>, %arg9: memref<1x128xf32, #tpu.memory_space<vmem>>, %arg10: memref<16x2xf32, #tpu.memory_space<vmem>>) attributes {dimension_semantics = [#tpu.dimension_semantics<parallel>], iteration_bounds = array<i64: 1>, scalar_prefetch = 0 : i64, scratch_operands = 0 : i64, tpu.core_type = #tpu.core_type<tc>, window_params = [{transform_indices = @transform_0, window_bounds = array<i64: 16, 32>}, {pipeline_mode = #tpu.pipeline_mode<synchronous>, transform_indices = @transform_1, window_bounds = array<i64: 32, 128>}, {pipeline_mode = #tpu.pipeline_mode<synchronous>, transform_indices = @transform_2, window_bounds = array<i64: 1, 128>}, {pipeline_mode = #tpu.pipeline_mode<synchronous>, transform_indices = @transform_3, window_bounds = array<i64: 128, 128>}, {pipeline_mode = #tpu.pipeline_mode<synchronous>, transform_indices = @transform_4, window_bounds = array<i64: 1, 128>}, {pipeline_mode = #tpu.pipeline_mode<synchronous>, transform_indices = @transform_5, window_bounds = array<i64: 128, 16>}, {pipeline_mode = #tpu.pipeline_mode<synchronous>, transform_indices = @transform_6, window_bounds = array<i64: 1, 16>}, {pipeline_mode = #tpu.pipeline_mode<synchronous>, transform_indices = @transform_7, window_bounds = array<i64: 16, 128>}, {pipeline_mode = #tpu.pipeline_mode<synchronous>, transform_indices = @transform_8, window_bounds = array<i64: 1, 128>}, {transform_indices = @transform_9, window_bounds = array<i64: 16, 2>}]} {
    %c0 = arith.constant 0 : index
    %c0_0 = arith.constant 0 : index
    %0 = vector.load %arg1[%c0, %c0_0] : memref<16x32xbf16, #tpu.memory_space<vmem>>, vector<16x32xbf16>
    %c0_1 = arith.constant 0 : index
    %c0_2 = arith.constant 0 : index
    %1 = vector.load %arg2[%c0_1, %c0_2] : memref<32x128xbf16, #tpu.memory_space<vmem>>, vector<32x128xbf16>
    %cst = arith.constant dense<0.000000e+00> : vector<16x128xf32>
    %2 = tpu.matmul %0, %1, %cst {dimension_numbers = #tpu.dot_dimension_numbers<[1], [0], [0], [1], [0, 0, 1, 1], [], []>} : vector<16x32xbf16>, vector<32x128xbf16>, vector<16x128xf32> -> vector<16x128xf32>
    %c0_3 = arith.constant 0 : index
    %c0_4 = arith.constant 0 : index
    %3 = vector.load %arg3[%c0_3, %c0_4] : memref<1x128xf32, #tpu.memory_space<vmem>>, vector<1x128xf32>
    %4 = vector.broadcast %3 : vector<1x128xf32> to vector<16x128xf32>
    %5 = arith.addf %2, %4 : vector<16x128xf32>
    %cst_5 = arith.constant 0.000000e+00 : f32
    %6 = vector.broadcast %cst_5 : f32 to vector<16x128xf32>
    %7 = arith.maximumf %5, %6 : vector<16x128xf32>
    %8 = arith.truncf %7 : vector<16x128xf32> to vector<16x128xbf16>
    %c0_6 = arith.constant 0 : index
    %c0_7 = arith.constant 0 : index
    %9 = vector.load %arg4[%c0_6, %c0_7] : memref<128x128xbf16, #tpu.memory_space<vmem>>, vector<128x128xbf16>
    %cst_8 = arith.constant dense<0.000000e+00> : vector<16x128xf32>
    %10 = tpu.matmul %8, %9, %cst_8 {dimension_numbers = #tpu.dot_dimension_numbers<[1], [0], [0], [1], [0, 0, 1, 1], [], []>} : vector<16x128xbf16>, vector<128x128xbf16>, vector<16x128xf32> -> vector<16x128xf32>
    %c0_9 = arith.constant 0 : index
    %c0_10 = arith.constant 0 : index
    %11 = vector.load %arg5[%c0_9, %c0_10] : memref<1x128xf32, #tpu.memory_space<vmem>>, vector<1x128xf32>
    %12 = vector.broadcast %11 : vector<1x128xf32> to vector<16x128xf32>
    %13 = arith.addf %10, %12 : vector<16x128xf32>
    %cst_11 = arith.constant 0.000000e+00 : f32
    %14 = vector.broadcast %cst_11 : f32 to vector<16x128xf32>
    %15 = arith.maximumf %13, %14 : vector<16x128xf32>
    %16 = arith.truncf %15 : vector<16x128xf32> to vector<16x128xbf16>
    %c0_12 = arith.constant 0 : index
    %c0_13 = arith.constant 0 : index
    %17 = vector.load %arg6[%c0_12, %c0_13] : memref<128x16xbf16, #tpu.memory_space<vmem>>, vector<128x16xbf16>
    %cst_14 = arith.constant dense<0.000000e+00> : vector<16x16xf32>
    %18 = tpu.matmul %16, %17, %cst_14 {dimension_numbers = #tpu.dot_dimension_numbers<[1], [0], [0], [1], [0, 0, 1, 1], [], []>} : vector<16x128xbf16>, vector<128x16xbf16>, vector<16x16xf32> -> vector<16x16xf32>
    %c0_15 = arith.constant 0 : index
    %c0_16 = arith.constant 0 : index
    %19 = vector.load %arg7[%c0_15, %c0_16] : memref<1x16xf32, #tpu.memory_space<vmem>>, vector<1x16xf32>
    %20 = vector.broadcast %19 : vector<1x16xf32> to vector<16x16xf32>
    %21 = arith.addf %18, %20 : vector<16x16xf32>
    %cst_17 = arith.constant 0.000000e+00 : f32
    %22 = vector.broadcast %cst_17 : f32 to vector<16x16xf32>
    %23 = arith.maximumf %21, %22 : vector<16x16xf32>
    %24 = arith.truncf %23 : vector<16x16xf32> to vector<16x16xbf16>
    %c0_18 = arith.constant 0 : index
    %c0_19 = arith.constant 0 : index
    %25 = vector.load %arg8[%c0_18, %c0_19] : memref<16x128xbf16, #tpu.memory_space<vmem>>, vector<16x128xbf16>
    %cst_20 = arith.constant dense<0.000000e+00> : vector<16x128xf32>
    %26 = tpu.matmul %24, %25, %cst_20 {dimension_numbers = #tpu.dot_dimension_numbers<[1], [0], [0], [1], [0, 0, 1, 1], [], []>} : vector<16x16xbf16>, vector<16x128xbf16>, vector<16x128xf32> -> vector<16x128xf32>
    %c0_21 = arith.constant 0 : index
    %c0_22 = arith.constant 0 : index
    %27 = vector.load %arg9[%c0_21, %c0_22] : memref<1x128xf32, #tpu.memory_space<vmem>>, vector<1x128xf32>
    %28 = vector.broadcast %27 : vector<1x128xf32> to vector<16x128xf32>
    %29 = arith.addf %26, %28 : vector<16x128xf32>
    %30 = vector.extract_strided_slice %29 {offsets = [0, 0], sizes = [16, 2], strides = [1, 1]} : vector<16x128xf32> to vector<16x2xf32>
    %31 = math.tanh %30 : vector<16x2xf32>
    %c0_23 = arith.constant 0 : index
    %c0_24 = arith.constant 0 : index
    %32 = vector.load %arg10[%c0_23, %c0_24] : memref<16x2xf32, #tpu.memory_space<vmem>>, vector<16x2xf32>
    tpu.vector_store %arg10[%c0_23, %c0_24], %31 {strides = array<i32>} : memref<16x2xf32, #tpu.memory_space<vmem>>, vector<16x2xf32>,
    return
  }
  func.func @transform_0(%arg0: i32) -> (i32, i32) {
    %c0_i32 = arith.constant 0 : i32
    %c0_i32_0 = arith.constant 0 : i32
    return %arg0, %c0_i32 : i32, i32
  }
  func.func @transform_1(%arg0: i32) -> (i32, i32) {
    %c0_i32 = arith.constant 0 : i32
    %c0_i32_0 = arith.constant 0 : i32
    %c0_i32_1 = arith.constant 0 : i32
    return %c0_i32, %c0_i32_0 : i32, i32
  }
  func.func @transform_2(%arg0: i32) -> (i32, i32) {
    %c0_i32 = arith.constant 0 : i32
    %c0_i32_0 = arith.constant 0 : i32
    %c0_i32_1 = arith.constant 0 : i32
    return %c0_i32, %c0_i32_0 : i32, i32
  }
  func.func @transform_3(%arg0: i32) -> (i32, i32) {
    %c0_i32 = arith.constant 0 : i32
    %c0_i32_0 = arith.constant 0 : i32
    %c0_i32_1 = arith.constant 0 : i32
    return %c0_i32, %c0_i32_0 : i32, i32
  }
  func.func @transform_4(%arg0: i32) -> (i32, i32) {
    %c0_i32 = arith.constant 0 : i32
    %c0_i32_0 = arith.constant 0 : i32
    %c0_i32_1 = arith.constant 0 : i32
    return %c0_i32, %c0_i32_0 : i32, i32
  }
  func.func @transform_5(%arg0: i32) -> (i32, i32) {
    %c0_i32 = arith.constant 0 : i32
    %c0_i32_0 = arith.constant 0 : i32
    %c0_i32_1 = arith.constant 0 : i32
    return %c0_i32, %c0_i32_0 : i32, i32
  }
  func.func @transform_6(%arg0: i32) -> (i32, i32) {
    %c0_i32 = arith.constant 0 : i32
    %c0_i32_0 = arith.constant 0 : i32
    %c0_i32_1 = arith.constant 0 : i32
    return %c0_i32, %c0_i32_0 : i32, i32
  }
  func.func @transform_7(%arg0: i32) -> (i32, i32) {
    %c0_i32 = arith.constant 0 : i32
    %c0_i32_0 = arith.constant 0 : i32
    %c0_i32_1 = arith.constant 0 : i32
    return %c0_i32, %c0_i32_0 : i32, i32
  }
  func.func @transform_8(%arg0: i32) -> (i32, i32) {
    %c0_i32 = arith.constant 0 : i32
    %c0_i32_0 = arith.constant 0 : i32
    %c0_i32_1 = arith.constant 0 : i32
    return %c0_i32, %c0_i32_0 : i32, i32
  }
  func.func @transform_9(%arg0: i32) -> (i32, i32) {
    %c0_i32 = arith.constant 0 : i32
    %c0_i32_0 = arith.constant 0 : i32
    return %arg0, %c0_i32 : i32, i32
  }
}

</mosaic_0001>

<llo_original>
// kernel: policy_forward.1
$region0: #{policy_forward.1}
  #allocation0 [shape = 'u32[]', space=smem, size = 0x4, offset = 0x4, fixed_abs, tag = 'smem constant byte address 0x4 - core index']
  #allocation1 [shape = 'u32[72,128]{1,0:T(1,128)}', space=vmem, size = 0x9000, scoped, tag = 'internal scratch']
  %s0 = inlined_call_operand.vmem [shape: bf16[16,32], index: 0, kind: input, shape index: {}]
  %s1 = inlined_call_operand.hbm [shape: bf16[32,128], index: 1, kind: input, shape index: {}]
  %s2 = inlined_call_operand.vmem [shape: f32[1,128], index: 2, kind: input, shape index: {}]
  %s3 = inlined_call_operand.vmem [shape: bf16[128,128], index: 3, kind: input, shape index: {}]
  %s4 = inlined_call_operand.vmem [shape: f32[1,128], index: 4, kind: input, shape index: {}]
  %s5 = inlined_call_operand.vmem [shape: bf16[128,16], index: 5, kind: input, shape index: {}]
  %s6 = inlined_call_operand.vmem [shape: f32[1,16], index: 6, kind: input, shape index: {}]
  %s7 = inlined_call_operand.vmem [shape: bf16[16,128], index: 7, kind: input, shape index: {}]
  %s8 = inlined_call_operand.vmem [shape: f32[1,128], index: 8, kind: input, shape index: {}]
  %s9 = inlined_call_operand.vmem [shape: f32[16,2], index: 9, kind: output, shape index: {}]
  %s10 = sld [smem:[#allocation0]]
  $region50: #{policy_forward.1} parent=0
    _
  %s12 = ssub.s32 1, %s10
  %s13 = scalar_select 0, %s12, %s10
  $region1: #{policy_forward.1} parent=0
    #allocation2 [shape = 'u8[8192]{0}', space=vmem, size = 0x2000, scoped, tag = 'input window, operand 1, single buffered']
    #allocation3 [shape = 's32[1]{0}', space=sflag, size = 0x4, scoped, tag = 'scoped memory for policy_forward.1']
    %14 = vsyncpa [#allocation3], 0
    // Predicated region
    $region2: #{policy_forward.1} parent=1 // pred_check
      _
    $region3: #{policy_forward.1} parent=1 // pred_check_branch
      %16 = sbr.rel (0) target = $region5
    $region4: #{policy_forward.1} parent=1 // pred_region
      _
    $region5: #{policy_forward.1} parent=1 // pred_fallthru
      _
    // Predicated region
    $region6: #{policy_forward.1} parent=1 // pred_check
      _
    $region7: #{policy_forward.1} parent=1 // pred_check_branch
      %18 = sbr.rel (0) target = $region9
    $region8: #{policy_forward.1} parent=1 // pred_region
      %20 = vsyncadd [#allocation3], 0
      %s21 = sshll.u32 %s1, 4
      %s22 = int_to_ptr.hbm [resolvable:$true] %s21
      %s23 = sshll.u32 [#allocation2], 4
      %s24 = int_to_ptr.vmem [resolvable:$true] %s23
      %29 = dma.hbm_to_vmem [thread:$0]  %s22, 256, %s24, [#allocation3], 64, 64, 4
    $region9: #{policy_forward.1} parent=1 // pred_fallthru
      _
    // Predicated region
    $region10: #{policy_forward.1} parent=1 // pred_check
      _
    $region11: #{policy_forward.1} parent=1 // pred_check_branch
      %31 = sbr.rel (0) target = $region13
    $region12: #{policy_forward.1} parent=1 // pred_region
      _
    $region13: #{policy_forward.1} parent=1 // pred_fallthru
      _
    // Predicated region
    $region14: #{policy_forward.1} parent=1 // pred_check
      _
    $region15: #{policy_forward.1} parent=1 // pred_check_branch
      %33 = sbr.rel (0) target = $region17
    $region16: #{policy_forward.1} parent=1 // pred_region
      _
    $region17: #{policy_forward.1} parent=1 // pred_fallthru
      _
    // Predicated region
    $region18: #{policy_forward.1} parent=1 // pred_check
      _
    $region19: #{policy_forward.1} parent=1 // pred_check_branch
      %35 = sbr.rel (0) target = $region21
    $region20: #{policy_forward.1} parent=1 // pred_region
      _
    $region21: #{policy_forward.1} parent=1 // pred_fallthru
      _
    // Predicated region
    $region22: #{policy_forward.1} parent=1 // pred_check
      _
    $region23: #{policy_forward.1} parent=1 // pred_check_branch
      %37 = sbr.rel (0) target = $region25
    $region24: #{policy_forward.1} parent=1 // pred_region
      _
    $region25: #{policy_forward.1} parent=1 // pred_fallthru
      _
    // Predicated region
    $region26: #{policy_forward.1} parent=1 // pred_check
      _
    $region27: #{policy_forward.1} parent=1 // pred_check_branch
      %39 = sbr.rel (0) target = $region29
    $region28: #{policy_forward.1} parent=1 // pred_region
      _
    $region29: #{policy_forward.1} parent=1 // pred_fallthru
      _
    // Predicated region
    $region30: #{policy_forward.1} parent=1 // pred_check
      _
    $region31: #{policy_forward.1} parent=1 // pred_check_branch
      %41 = sbr.rel (0) target = $region33
    $region32: #{policy_forward.1} parent=1 // pred_region
      _
    $region33: #{policy_forward.1} parent=1 // pred_fallthru
      _
    // Predicated region
    $region34: #{policy_forward.1} parent=1 // pred_check
      _
    $region35: #{policy_forward.1} parent=1 // pred_check_branch
      %43 = sbr.rel (0) target = $region37
    $region36: #{policy_forward.1} parent=1 // pred_region
      _
    $region37: #{policy_forward.1} parent=1 // pred_fallthru
      _
    // Predicated region
    $region38: #{policy_forward.1} parent=1 // pred_check
      _
    $region39: #{policy_forward.1} parent=1 // pred_check_branch
      %45 = sbr.rel (0) target = $region41
    $region40: #{policy_forward.1} parent=1 // pred_region
      %47 = dma.done [#allocation3], 256
    $region41: #{policy_forward.1} parent=1 // pred_fallthru
      _
    %v49 = vld [vmem:[%s0] sm:$0xf]
    %v50 = vld [vmem:[%s0 + $0x4] sm:$0xf]
    %v51 = vld [vmem:[#allocation2] sm:$0xf]
    %v52 = vld [vmem:[#allocation2 + $0x4] sm:$0xf]
    %v53 = vld [vmem:[#allocation2 + $0x8] sm:$0xf]
    %v54 = vld [vmem:[#allocation2 + $0xc] sm:$0xf]
    %v55 = vld [vmem:[%s2] sm:$0x1]
    %v57 = vperm.slane %v55, 0
    %v61 = vunpack.c.l.b16 %v49
    %v62 = vunpack.c.l.b16 %v50
    %v63 = vpack.c.b16 %v62, %v61
    %v68 = vunpack.c.l.b16 %v51
    %v69 = vunpack.c.l.b16 %v52
    %v70 = vunpack.c.l.b16 %v53
    %v71 = vunpack.c.l.b16 %v54
    %v72 = vpack.c.b16 %v69, %v68
    %v73 = vpack.c.b16 %v71, %v70
    %vm76 = vcmask 261120
    %v78 = vsel %vm76, %v63, 0
    %80 = vmatpush.bf16.msra.mxu0 0
    %81 = vmatpush.bf16.msra.mxu0 0
    %82 = vmatpush.bf16.msra.mxu0 0
    %83 = vmatpush.bf16.msra.mxu0 0
    %84 = vmatpush.bf16.msra.mxu0 0
    %85 = vmatpush.bf16.msra.mxu0 0
    %86 = vmatpush.bf16.msra.mxu0 %v73
    %87 = vmatpush.bf16.msra.mxu0 %v72
    %88 = vmatmul.bf16.gmra.mxu0 %v78
    %v89 = vpop.f32.mrf.mxu0
    %v90 = vadd.f32 %v57, %v89
    %v91 = vpop.f32.mrf.mxu0
    %v92 = vadd.f32 %v57, %v91
    %93 = vdwg.mxu0
    %v94 = vmax.f32 %v90, 0.0
    %v95 = vmax.f32 %v92, 0.0
    %v96 = vpack.c.bf16 %v95, %v94
    %v97 = vld [vmem:[%s3] sm:$0xf]
    %v98 = vld [vmem:[%s3 + $0x4] sm:$0xf]
    %v99 = vld [vmem:[%s3 + $0x8] sm:$0xf]
    %v100 = vld [vmem:[%s3 + $0xc] sm:$0xf]
    %v101 = vld [vmem:[%s3 + $0x10] sm:$0xf]
    %v102 = vld [vmem:[%s3 + $0x14] sm:$0xf]
    %v103 = vld [vmem:[%s3 + $0x18] sm:$0xf]
    %v104 = vld [vmem:[%s3 + $0x1c] sm:$0xf]
    %v105 = vld [vmem:[%s3 + $0x20] sm:$0xf]
    %v106 = vld [vmem:[%s3 + $0x24] sm:$0xf]
    %v107 = vld [vmem:[%s3 + $0x28] sm:$0xf]
    %v108 = vld [vmem:[%s3 + $0x2c] sm:$0xf]
    %v109 = vld [vmem:[%s3 + $0x30] sm:$0xf]
    %v110 = vld [vmem:[%s3 + $0x34] sm:$0xf]
    %v111 = vld [vmem:[%s3 + $0x38] sm:$0xf]
    %v112 = vld [vmem:[%s3 + $0x3c] sm:$0xf]
    %v113 = vld [vmem:[%s4] sm:$0x1]
    %v115 = vperm.slane %v113, 0
    %v133 = vunpack.c.l.b16 %v97
    %v134 = vunpack.c.l.b16 %v98
    %v135 = vunpack.c.l.b16 %v99
    %v136 = vunpack.c.l.b16 %v100
    %v137 = vunpack.c.l.b16 %v101
    %v138 = vunpack.c.l.b16 %v102
    %v139 = vunpack.c.l.b16 %v103
    %v140 = vunpack.c.l.b16 %v104
    %v141 = vunpack.c.l.b16 %v105
    %v142 = vunpack.c.l.b16 %v106
    %v143 = vunpack.c.l.b16 %v107
    %v144 = vunpack.c.l.b16 %v108
    %v145 = vunpack.c.l.b16 %v109
    %v146 = vunpack.c.l.b16 %v110
    %v147 = vunpack.c.l.b16 %v111
    %v148 = vunpack.c.l.b16 %v112
    %v149 = vpack.c.b16 %v134, %v133
    %v150 = vpack.c.b16 %v136, %v135
    %v151 = vpack.c.b16 %v138, %v137
    %v152 = vpack.c.b16 %v140, %v139
    %v153 = vpack.c.b16 %v142, %v141
    %v154 = vpack.c.b16 %v144, %v143
    %v155 = vpack.c.b16 %v146, %v145
    %v156 = vpack.c.b16 %v148, %v147
    %165 = vmatpush.bf16.msra.mxu0 %v156
    %166 = vmatpush.bf16.msra.mxu0 %v155
    %167 = vmatpush.bf16.msra.mxu0 %v154
    %168 = vmatpush.bf16.msra.mxu0 %v153
    %169 = vmatpush.bf16.msra.mxu0 %v152
    %170 = vmatpush.bf16.msra.mxu0 %v151
    %171 = vmatpush.bf16.msra.mxu0 %v150
    %172 = vmatpush.bf16.msra.mxu0 %v149
    %173 = vmatmul.bf16.gmra.mxu0 %v96
    %v174 = vpop.f32.mrf.mxu0
    %v175 = vadd.f32 %v115, %v174
    %v176 = vpop.f32.mrf.mxu0
    %v177 = vadd.f32 %v115, %v176
    %178 = vdwg.mxu0
    %v179 = vmax.f32 %v175, 0.0
    %v180 = vmax.f32 %v177, 0.0
    %v181 = vpack.c.bf16 %v180, %v179
    %v182 = vld [vmem:[%s5] sm:$0xf]
    %v183 = vld [vmem:[%s5 + $0x4] sm:$0xf]
    %v184 = vld [vmem:[%s5 + $0x8] sm:$0xf]
    %v185 = vld [vmem:[%s5 + $0xc] sm:$0xf]
    %v186 = vld [vmem:[%s5 + $0x10] sm:$0xf]
    %v187 = vld [vmem:[%s5 + $0x14] sm:$0xf]
    %v188 = vld [vmem:[%s5 + $0x18] sm:$0xf]
    %v189 = vld [vmem:[%s5 + $0x1c] sm:$0xf]
    %v190 = vld [vmem:[%s5 + $0x20] sm:$0xf]
    %v191 = vld [vmem:[%s5 + $0x24] sm:$0xf]
    %v192 = vld [vmem:[%s5 + $0x28] sm:$0xf]
    %v193 = vld [vmem:[%s5 + $0x2c] sm:$0xf]
    %v194 = vld [vmem:[%s5 + $0x30] sm:$0xf]
    %v195 = vld [vmem:[%s5 + $0x34] sm:$0xf]
    %v196 = vld [vmem:[%s5 + $0x38] sm:$0xf]
    %v197 = vld [vmem:[%s5 + $0x3c] sm:$0xf]
    %v198 = vld [vmem:[%s6] sm:$0x1]
    %v200 = vperm.slane %v198, 0
    %v218 = vunpack.c.l.b16 %v182
    %v219 = vunpack.c.l.b16 %v183
    %v220 = vunpack.c.l.b16 %v184
    %v221 = vunpack.c.l.b16 %v185
    %v222 = vunpack.c.l.b16 %v186
    %v223 = vunpack.c.l.b16 %v187
    %v224 = vunpack.c.l.b16 %v188
    %v225 = vunpack.c.l.b16 %v189
    %v226 = vunpack.c.l.b16 %v190
    %v227 = vunpack.c.l.b16 %v191
    %v228 = vunpack.c.l.b16 %v192
    %v229 = vunpack.c.l.b16 %v193
    %v230 = vunpack.c.l.b16 %v194
    %v231 = vunpack.c.l.b16 %v195
    %v232 = vunpack.c.l.b16 %v196
    %v233 = vunpack.c.l.b16 %v197
    %v234 = vpack.c.b16 %v219, %v218
    %v235 = vpack.c.b16 %v221, %v220
    %v236 = vpack.c.b16 %v223, %v222
    %v237 = vpack.c.b16 %v225, %v224
    %v238 = vpack.c.b16 %v227, %v226
    %v239 = vpack.c.b16 %v229, %v228
    %v240 = vpack.c.b16 %v231, %v230
    %v241 = vpack.c.b16 %v233, %v232
    %250 = vmatpush.bf16.msra.mxu0 %v241
    %251 = vmatpush.bf16.msra.mxu0 %v240
    %252 = vmatpush.bf16.msra.mxu0 %v239
    %253 = vmatpush.bf16.msra.mxu0 %v238
    %254 = vmatpush.bf16.msra.mxu0 %v237
    %255 = vmatpush.bf16.msra.mxu0 %v236
    %256 = vmatpush.bf16.msra.mxu0 %v235
    %257 = vmatpush.bf16.msra.mxu0 %v234
    %258 = vmatmul.bf16.gmra.mxu0 %v181
    %v259 = vpop.f32.mrf.mxu0
    %v260 = vadd.f32 %v200, %v259
    %v261 = vpop.f32.mrf.mxu0
    %v262 = vadd.f32 %v200, %v261
    %263 = vdwg.mxu0
    %v264 = vmax.f32 %v260, 0.0
    %v265 = vmax.f32 %v262, 0.0
    %v266 = vpack.c.bf16 %v265, %v264
    %v267 = vld [vmem:[%s7] sm:$0xf]
    %v268 = vld [vmem:[%s7 + $0x4] sm:$0xf]
    %v269 = vld [vmem:[%s8] sm:$0x1]
    %v271 = vperm.slane %v269, 0
    %v275 = vunpack.c.l.b16 %v267
    %v276 = vunpack.c.l.b16 %v268
    %v277 = vpack.c.b16 %v276, %v275
    %vm279 = vcmask 130048
    %v281 = vsel %vm279, %v266, 0
    %283 = vmatpush.bf16.msra.mxu0 0
    %284 = vmatpush.bf16.msra.mxu0 0
    %285 = vmatpush.bf16.msra.mxu0 0
    %286 = vmatpush.bf16.msra.mxu0 0
    %287 = vmatpush.bf16.msra.mxu0 0
    %288 = vmatpush.bf16.msra.mxu0 0
    %289 = vmatpush.bf16.msra.mxu0 0
    %290 = vmatpush.bf16.msra.mxu0 %v277
    %291 = vmatmul.bf16.gmra.mxu0 %v281
    %v292 = vpop.f32.mrf.mxu0
    %v293 = vadd.f32 %v271, %v292
    %v294 = vpop.f32.mrf.mxu0
    %v295 = vadd.f32 %v271, %v294
    %296 = vdwg.mxu0
    %v297 = vtanh.pop %v293
    %v298 = vtanh.pop %v295
    %vm299 = vcmask 15360
    %300 = vst.msk [vmem:[%s9] sm:$0xff] %vm299, %v297
    %301 = vst.msk [vmem:[%s9 + $0x8] sm:$0xff] %vm299, %v298
    // Predicated region
    $region42: #{policy_forward.1} parent=1 // pred_check
      _
    $region43: #{policy_forward.1} parent=1 // pred_check_branch
      %303 = sbr.rel (0) target = $region45
    $region44: #{policy_forward.1} parent=1 // pred_region
      _
    $region45: #{policy_forward.1} parent=1 // pred_fallthru
      _
    // Predicated region
    $region46: #{policy_forward.1} parent=1 // pred_check
      _
    $region47: #{policy_forward.1} parent=1 // pred_check_branch
      %305 = sbr.rel (0) target = $region49
    $region48: #{policy_forward.1} parent=1 // pred_region
      _
    $region49: #{policy_forward.1} parent=1 // pred_fallthru
      _
    %306 = vsyncpa [#allocation3], 1

</llo_original>
